<compile_context>
chip_gen: v6e
topology: v6e:2x2x1
jax: 0.10.0
libtpu: 0.0.40
codegen_flags: <defaults>
</compile_context>

<pallas_src>
import functools
import math

import jax
import jax.numpy as jnp
from jax import lax
from jax.experimental import pallas as pl
from jax.experimental.pallas import tpu as pltpu


_NEG_BIG = -1e30        # safe "minus infinity" for masking padded columns
_EPS_SQ = 1e-8          # torch.nn.CosineSimilarity eps (per-row squared-norm clamp)
                        # TODO(synk): torch clamps the *product* of norms; only differs
                        # for near-zero-norm rows.


def _round_up(x, m):
    return (x + m - 1) // m * m


def _nt_xent_kernel(z_row_ref, z_col_ref, pos_ref, out_ref,
                    m_sc, l_sc, diag_sc,
                    *, n_valid, col_tile, exp_dtype, mask_pad):
    """One (row_tile, col_tile) step of the flash-style online logsumexp."""
    c = pl.program_id(1)                     # column (reduction) step
    n_col_steps = pl.num_programs(1)

    @pl.when(c == 0)
    def _init():
        zr = z_row_ref[...].astype(jnp.float32)
        # Self-similarity of a pre-normalized row == its squared norm
        # (== 1/temperature up to streaming-dtype rounding).  Matches what the
        # MXU accumulates on the diagonal, so we can remove it analytically.
        diag = jnp.sum(zr * zr, axis=-1, keepdims=True)
        diag_sc[...] = diag
        m_sc[...] = diag                     # diagonal is (about) the row max
        l_sc[...] = jnp.zeros_like(l_sc)

    # (tr, tc) similarity tile on the MXU.  Rows/cols already carry the
    # 1/sqrt(temperature) factor, so this IS cos_sim / temperature.
    s = lax.dot_general(z_row_ref[...], z_col_ref[...],
                        (((1,), (1,)), ((), ())),
                        preferred_element_type=jnp.float32)

    if mask_pad:
        # Only emitted when N was padded: one lane-iota compare per column.
        col_g = c * col_tile + lax.broadcasted_iota(jnp.int32, (1, col_tile), 1)
        s = jnp.where(col_g >= n_valid, _NEG_BIG, s)

    # Online logsumexp accumulation across column tiles.
    m_prev = m_sc[...]
    m_new = jnp.maximum(m_prev, jnp.max(s, axis=-1, keepdims=True))
    p = jnp.exp((s - m_new).astype(exp_dtype)).astype(jnp.float32)
    l_sc[...] = (l_sc[...] * jnp.exp(m_prev - m_new)
                 + jnp.sum(p, axis=-1, keepdims=True))
    m_sc[...] = m_new

    @pl.when(c == n_col_steps - 1)
    def _finalize():
        m = m_sc[...]
        # Remove the self-similarity term analytically, using the same exp
        # precision as the accumulation so the subtraction cancels it tightly.
        self_term = jnp.exp((diag_sc[...] - m).astype(exp_dtype)).astype(jnp.float32)
        l = l_sc[...] - self_term
        out_ref[...] = m + jnp.log(l) - pos_ref[...]     # per-row CE term


def simclr_loss(z_i, z_j, temperature, *, row_tile=512, col_tile=1024,
                use_bf16_stream=True, use_bf16_exp=True,
                vmem_limit_bytes=None):
    """NT-Xent loss: CrossEntropyLoss(reduction='sum')/N of the SimCLR module."""
    assert z_i.shape == z_j.shape and z_i.ndim == 2
    b, d = z_i.shape
    n = 2 * b

    # ---- O(N*D) preprocessing in XLA (normalize, positive logit) ----------
    z = jnp.concatenate([z_i, z_j], axis=0).astype(jnp.float32)          # (N, D)
    inv_sqrt_t = jnp.float32(1.0 / math.sqrt(float(temperature)))
    sq = jnp.sum(z * z, axis=-1, keepdims=True)
    zn = z * (inv_sqrt_t * lax.rsqrt(jnp.maximum(sq, _EPS_SQ)))          # f32
    zn_pair = jnp.concatenate([zn[b:], zn[:b]], axis=0)                  # partner view
    pos = jnp.sum(zn * zn_pair, axis=-1, keepdims=True)                  # (N, 1) f32

    stream_dtype = jnp.bfloat16 if use_bf16_stream else jnp.float32
    zn = zn.astype(stream_dtype)

    # ---- tiling / padding ---------------------------------------------------
    d_pad = _round_up(d, 128)                # lane-dense MXU contraction dim
    n_pad = _round_up(n, 128)
    q = n_pad // 128

    def _pick_tile(limit):
        limit = max(_round_up(int(limit), 128), 128)
        best = 1
        for cand in range(1, q + 1):
            if q % cand == 0 and cand * 128 <= limit:
                best = cand
        return best * 128

    tr = _pick_tile(row_tile)
    tc = _pick_tile(col_tile)

    # Generation-aware VMEM budget (v7x: 64 MiB physical -> ~48 MiB; v5e/v6e:
    # 128 MiB -> 96 MiB).  Shrink tiles if the double-buffered input blocks
    # plus the (tr, tc) f32 intermediates would not fit comfortably.
    if vmem_limit_bytes is None:
        try:
            cap = pltpu.get_tpu_info().vmem_capacity_bytes
            vmem_limit_bytes = min((cap * 3) // 4, 100 * 1024 * 1024)
        except Exception:
            vmem_limit_bytes = 64 * 1024 * 1024
    vmem_limit_bytes = int(vmem_limit_bytes)
    itemsize = jnp.dtype(stream_dtype).itemsize

    def _footprint(tr_, tc_):
        blocks = 2 * (tr_ + tc_) * d_pad * itemsize      # double-buffered z tiles
        interm = 2 * tr_ * tc_ * 4                       # s and p (f32)
        small = 8 * tr_ * 4                              # pos/out/m/l/diag
        return blocks + interm + small

    budget = (vmem_limit_bytes * 7) // 10
    while _footprint(tr, tc) > budget and tc >= 256:
        tc //= 2
    while _footprint(tr, tc) > budget and tr >= 256:
        tr //= 2

    if n_pad != n or d_pad != d:
        zn = jnp.pad(zn, ((0, n_pad - n), (0, d_pad - d)))
        pos = jnp.pad(pos, ((0, n_pad - n), (0, 0)))

    kernel = functools.partial(
        _nt_xent_kernel,
        n_valid=n, col_tile=tc,
        exp_dtype=(jnp.bfloat16 if use_bf16_exp else jnp.float32),
        mask_pad=(n_pad != n))

    per_row = pl.pallas_call(
        kernel,
        out_shape=jax.ShapeDtypeStruct((n_pad, 1), jnp.float32),
        grid_spec=pltpu.PrefetchScalarGridSpec(
            num_scalar_prefetch=0,
            grid=(n_pad // tr, n_pad // tc),
            in_specs=[
                pl.BlockSpec((tr, d_pad), lambda r, c: (r, 0)),   # z row tile
                pl.BlockSpec((tc, d_pad), lambda r, c: (c, 0)),   # z col tile
                pl.BlockSpec((tr, 1), lambda r, c: (r, 0)),       # positive logit
            ],
            out_specs=pl.BlockSpec((tr, 1), lambda r, c: (r, 0)),
            scratch_shapes=[
                pltpu.VMEM((tr, 1), jnp.float32),   # running max m
                pltpu.VMEM((tr, 1), jnp.float32),   # running sum l
                pltpu.VMEM((tr, 1), jnp.float32),   # per-row self-similarity
            ]),
        compiler_params=pltpu.CompilerParams(
            dimension_semantics=("parallel", "arbitrary"),
            vmem_limit_bytes=vmem_limit_bytes),
    )(zn, zn, pos)

    # Padded rows (if any) are sliced away here; final reduction is O(N).
    return jnp.sum(per_row[:n, 0]) / jnp.float32(n)


def _simclr_loss_ref(z_i, z_j, temperature):
    """Pure-JAX f32 reference mirroring the PyTorch module step by step."""
    b = z_i.shape[0]
    n = 2 * b
    z = jnp.concatenate([z_i, z_j], axis=0).astype(jnp.float32)
    norm = jnp.linalg.norm(z, axis=-1)
    sim = (z @ z.T) / jnp.maximum(norm[:, None] * norm[None, :], 1e-8) / temperature
    pos = jnp.concatenate([jnp.diagonal(sim, b), jnp.diagonal(sim, -b)])  # (N,)
    mask = jnp.ones((n, n), dtype=bool)
    idx = jnp.arange(n)
    mask = mask.at[idx, idx].set(False)
    ib = jnp.arange(b)
    mask = mask.at[ib, b + ib].set(False)
    mask = mask.at[b + ib, ib].set(False)
    neg = sim[mask].reshape(n, n - 2)
    logits = jnp.concatenate([pos[:, None], neg], axis=1)
    lse = jax.scipy.special.logsumexp(logits, axis=1)
    return jnp.sum(lse - logits[:, 0]) / n


if __name__ == "__main__":
    temperature = 0.5
    key = jax.random.PRNGKey(0)
    k1, k2, k3, k4 = jax.random.split(key, 4)

    # Case 1: small single-tile case with heavy N and D padding
    # (B=4, D=32 -> N=8 padded to 128, D padded to 128, grid (1, 1)).
    z_i = jax.random.normal(k1, (4, 32), dtype=jnp.float32)
    z_j = jax.random.normal(k2, (4, 32), dtype=jnp.float32)
    loss = simclr_loss(z_i, z_j, temperature)
    jax.block_until_ready(loss)
    ref = _simclr_loss_ref(z_i, z_j, temperature)
    # bf16 Gram tiles + bf16 softmax exp -> relaxed tolerance vs f32 reference.
    assert jnp.allclose(loss, ref, atol=5e-2, rtol=5e-2), (loss, ref)

    # Case 2: multi-tile case exercising the online logsumexp across column
    # steps, the parallel row axis, D padding and the pad-column mask
    # (B=190, D=80 -> N=380 padded to 384, grid (3, 3) with 128x128 tiles).
    z_i2 = jax.random.normal(k3, (190, 80), dtype=jnp.float32)
    z_j2 = jax.random.normal(k4, (190, 80), dtype=jnp.float32)
    loss2 = simclr_loss(z_i2, z_j2, temperature, row_tile=128, col_tile=128)
    jax.block_until_ready(loss2)
    ref2 = _simclr_loss_ref(z_i2, z_j2, temperature)
    assert jnp.allclose(loss2, ref2, atol=5e-2, rtol=5e-2), (loss2, ref2)

    print("KERNEL_OK")
</pallas_src>

<mosaic_0001>
module attributes {stable_mosaic.version = 11 : i64} {
  func.func @_nt_xent_kernel(%arg0: i32, %arg1: i32, %arg2: memref<128x128xbf16, #tpu.memory_space<vmem>>, %arg3: memref<128x128xbf16, #tpu.memory_space<vmem>>, %arg4: memref<128x1xf32, #tpu.memory_space<vmem>>, %arg5: memref<128x1xf32, #tpu.memory_space<vmem>>, %arg6: memref<128x1xf32, #tpu.memory_space<vmem>>, %arg7: memref<128x1xf32, #tpu.memory_space<vmem>>, %arg8: memref<128x1xf32, #tpu.memory_space<vmem>>) attributes {dimension_semantics = [#tpu.dimension_semantics<parallel>, #tpu.dimension_semantics<arbitrary>], iteration_bounds = array<i64: 1, 1>, scalar_prefetch = 0 : i64, scratch_operands = 3 : i64, tpu.core_type = #tpu.core_type<tc>, window_params = [{transform_indices = @transform_0, window_bounds = array<i64: 128, 128>}, {transform_indices = @transform_1, window_bounds = array<i64: 128, 128>}, {transform_indices = @transform_2, window_bounds = array<i64: 128, 1>}, {transform_indices = @transform_3, window_bounds = array<i64: 128, 1>}]} {
    %c0_i32 = arith.constant 0 : i32
    %0 = arith.cmpi eq, %arg1, %c0_i32 : i32
    %1 = arith.extui %0 : i1 to i32
    %c0_i32_0 = arith.constant 0 : i32
    %2 = arith.cmpi ne, %1, %c0_i32_0 : i32
    scf.if %2 {
      %c0_17 = arith.constant 0 : index
      %c0_18 = arith.constant 0 : index
      %37 = vector.load %arg2[%c0_17, %c0_18] : memref<128x128xbf16, #tpu.memory_space<vmem>>, vector<128x128xbf16>
      %38 = arith.extf %37 : vector<128x128xbf16> to vector<128x128xf32>
      %39 = arith.mulf %38, %38 : vector<128x128xf32>
      %cst_19 = arith.constant dense<0.000000e+00> : vector<128xf32>
      %40 = vector.multi_reduction <add>, %39, %cst_19 [1] : vector<128x128xf32> to vector<128xf32>
      %41 = vector.shape_cast %40 : vector<128xf32> to vector<128x1xf32>
      %c0_20 = arith.constant 0 : index
      %c0_21 = arith.constant 0 : index
      %42 = vector.load %arg8[%c0_20, %c0_21] : memref<128x1xf32, #tpu.memory_space<vmem>>, vector<128x1xf32>
      tpu.vector_store %arg8[%c0_20, %c0_21], %41 {strides = array<i32>} : memref<128x1xf32, #tpu.memory_space<vmem>>, vector<128x1xf32>,
      %c0_22 = arith.constant 0 : index
      %c0_23 = arith.constant 0 : index
      %43 = vector.load %arg6[%c0_22, %c0_23] : memref<128x1xf32, #tpu.memory_space<vmem>>, vector<128x1xf32>
      tpu.vector_store %arg6[%c0_22, %c0_23], %41 {strides = array<i32>} : memref<128x1xf32, #tpu.memory_space<vmem>>, vector<128x1xf32>,
      %cst_24 = arith.constant 0.000000e+00 : f32
      %44 = vector.broadcast %cst_24 : f32 to vector<128x1xf32>
      %c0_25 = arith.constant 0 : index
      %c0_26 = arith.constant 0 : index
      %45 = vector.load %arg7[%c0_25, %c0_26] : memref<128x1xf32, #tpu.memory_space<vmem>>, vector<128x1xf32>
      tpu.vector_store %arg7[%c0_25, %c0_26], %44 {strides = array<i32>} : memref<128x1xf32, #tpu.memory_space<vmem>>, vector<128x1xf32>,
    } else {
    }
    %c0 = arith.constant 0 : index
    %c0_1 = arith.constant 0 : index
    %3 = vector.load %arg2[%c0, %c0_1] : memref<128x128xbf16, #tpu.memory_space<vmem>>, vector<128x128xbf16>
    %c0_2 = arith.constant 0 : index
    %c0_3 = arith.constant 0 : index
    %4 = vector.load %arg3[%c0_2, %c0_3] : memref<128x128xbf16, #tpu.memory_space<vmem>>, vector<128x128xbf16>
    %cst = arith.constant dense<0.000000e+00> : vector<128x128xf32>
    %5 = tpu.matmul %3, %4, %cst {dimension_numbers = #tpu.dot_dimension_numbers<[1], [1], [0], [0], [0, 0, 1, 0], [], []>} : vector<128x128xbf16>, vector<128x128xbf16>, vector<128x128xf32> -> vector<128x128xf32>
    %c128_i32 = arith.constant 128 : i32
    %6 = arith.muli %arg1, %c128_i32 : i32
    %7 = tpu.iota {dimensions = array<i32: 1>} : vector<1x128xi32>
    %8 = vector.broadcast %6 : i32 to vector<1x128xi32>
    %9 = arith.addi %8, %7 : vector<1x128xi32>
    %c8_i32 = arith.constant 8 : i32
    %10 = vector.broadcast %c8_i32 : i32 to vector<1x128xi32>
    %11 = arith.cmpi sge, %9, %10 : vector<1x128xi32>
    %cst_4 = arith.constant -1.000000e+30 : f32
    %12 = vector.shape_cast %11 : vector<1x128xi1> to vector<1x128xi1>
    %13 = vector.broadcast %12 : vector<1x128xi1> to vector<128x128xi1>
    %14 = vector.broadcast %cst_4 : f32 to vector<128x128xf32>
    %15 = arith.select %13, %14, %5 : vector<128x128xi1>, vector<128x128xf32>
    %c0_5 = arith.constant 0 : index
    %c0_6 = arith.constant 0 : index
    %16 = vector.load %arg6[%c0_5, %c0_6] : memref<128x1xf32, #tpu.memory_space<vmem>>, vector<128x1xf32>
    %cst_7 = arith.constant dense<0xFF800000> : vector<128xf32>
    %17 = vector.multi_reduction <maximumf>, %15, %cst_7 [1] : vector<128x128xf32> to vector<128xf32>
    %18 = vector.shape_cast %17 : vector<128xf32> to vector<128x1xf32>
    %19 = arith.maximumf %16, %18 : vector<128x1xf32>
    %20 = vector.broadcast %19 : vector<128x1xf32> to vector<128x128xf32>
    %21 = arith.subf %15, %20 : vector<128x128xf32>
    %22 = arith.truncf %21 : vector<128x128xf32> to vector<128x128xbf16>
    %23 = math.exp %22 : vector<128x128xbf16>
    %24 = arith.extf %23 : vector<128x128xbf16> to vector<128x128xf32>
    %c0_8 = arith.constant 0 : index
    %c0_9 = arith.constant 0 : index
    %25 = vector.load %arg7[%c0_8, %c0_9] : memref<128x1xf32, #tpu.memory_space<vmem>>, vector<128x1xf32>
    %26 = arith.subf %16, %19 : vector<128x1xf32>
    %27 = math.exp %26 : vector<128x1xf32>
    %28 = arith.mulf %25, %27 : vector<128x1xf32>
    %cst_10 = arith.constant dense<0.000000e+00> : vector<128xf32>
    %29 = vector.multi_reduction <add>, %24, %cst_10 [1] : vector<128x128xf32> to vector<128xf32>
    %30 = vector.shape_cast %29 : vector<128xf32> to vector<128x1xf32>
    %31 = arith.addf %28, %30 : vector<128x1xf32>
    %c0_11 = arith.constant 0 : index
    %c0_12 = arith.constant 0 : index
    %32 = vector.load %arg7[%c0_11, %c0_12] : memref<128x1xf32, #tpu.memory_space<vmem>>, vector<128x1xf32>
    tpu.vector_store %arg7[%c0_11, %c0_12], %31 {strides = array<i32>} : memref<128x1xf32, #tpu.memory_space<vmem>>, vector<128x1xf32>,
    %c0_13 = arith.constant 0 : index
    %c0_14 = arith.constant 0 : index
    %33 = vector.load %arg6[%c0_13, %c0_14] : memref<128x1xf32, #tpu.memory_space<vmem>>, vector<128x1xf32>
    tpu.vector_store %arg6[%c0_13, %c0_14], %19 {strides = array<i32>} : memref<128x1xf32, #tpu.memory_space<vmem>>, vector<128x1xf32>,
    %c0_i32_15 = arith.constant 0 : i32
    %34 = arith.cmpi eq, %arg1, %c0_i32_15 : i32
    %35 = arith.extui %34 : i1 to i32
    %c0_i32_16 = arith.constant 0 : i32
    %36 = arith.cmpi ne, %35, %c0_i32_16 : i32
    scf.if %36 {
      %c0_17 = arith.constant 0 : index
      %c0_18 = arith.constant 0 : index
      %37 = vector.load %arg6[%c0_17, %c0_18] : memref<128x1xf32, #tpu.memory_space<vmem>>, vector<128x1xf32>
      %c0_19 = arith.constant 0 : index
      %c0_20 = arith.constant 0 : index
      %38 = vector.load %arg8[%c0_19, %c0_20] : memref<128x1xf32, #tpu.memory_space<vmem>>, vector<128x1xf32>
      %39 = arith.subf %38, %37 : vector<128x1xf32>
      %40 = arith.truncf %39 : vector<128x1xf32> to vector<128x1xbf16>
      %41 = math.exp %40 : vector<128x1xbf16>
      %42 = arith.extf %41 : vector<128x1xbf16> to vector<128x1xf32>
      %c0_21 = arith.constant 0 : index
      %c0_22 = arith.constant 0 : index
      %43 = vector.load %arg7[%c0_21, %c0_22] : memref<128x1xf32, #tpu.memory_space<vmem>>, vector<128x1xf32>
      %44 = arith.subf %43, %42 : vector<128x1xf32>
      %45 = math.log %44 : vector<128x1xf32>
      %46 = arith.addf %37, %45 : vector<128x1xf32>
      %c0_23 = arith.constant 0 : index
      %c0_24 = arith.constant 0 : index
      %47 = vector.load %arg4[%c0_23, %c0_24] : memref<128x1xf32, #tpu.memory_space<vmem>>, vector<128x1xf32>
      %48 = arith.subf %46, %47 : vector<128x1xf32>
      %c0_25 = arith.constant 0 : index
      %c0_26 = arith.constant 0 : index
      %49 = vector.load %arg5[%c0_25, %c0_26] : memref<128x1xf32, #tpu.memory_space<vmem>>, vector<128x1xf32>
      tpu.vector_store %arg5[%c0_25, %c0_26], %48 {strides = array<i32>} : memref<128x1xf32, #tpu.memory_space<vmem>>, vector<128x1xf32>,
    } else {
    }
    return
  }
  func.func @transform_0(%arg0: i32, %arg1: i32) -> (i32, i32) {
    %c0_i32 = arith.constant 0 : i32
    %c0_i32_0 = arith.constant 0 : i32
    return %arg0, %c0_i32 : i32, i32
  }
  func.func @transform_1(%arg0: i32, %arg1: i32) -> (i32, i32) {
    %c0_i32 = arith.constant 0 : i32
    %c0_i32_0 = arith.constant 0 : i32
    return %arg1, %c0_i32 : i32, i32
  }
  func.func @transform_2(%arg0: i32, %arg1: i32) -> (i32, i32) {
    %c0_i32 = arith.constant 0 : i32
    %c0_i32_0 = arith.constant 0 : i32
    return %arg0, %c0_i32 : i32, i32
  }
  func.func @transform_3(%arg0: i32, %arg1: i32) -> (i32, i32) {
    %c0_i32 = arith.constant 0 : i32
    %c0_i32_0 = arith.constant 0 : i32
    return %arg0, %c0_i32 : i32, i32
  }
}

</mosaic_0001>

<llo_original>
// kernel: tpu_custom_call.1
$region0: #{tpu_custom_call.1}
  #allocation0 [shape = 'u32[]', space=smem, size = 0x4, offset = 0x4, fixed_abs, tag = 'smem constant byte address 0x4 - core index']
  #allocation1 [shape = 'u32[144,128]{1,0:T(1,128)}', space=vmem, size = 0x12000, scoped, tag = 'internal scratch']
  #allocation2 [shape = 'f32[128,1]{1,0:T(8,128)}', space=vmem, size = 0x10000, scoped, tag = 'scratch operand']
  #allocation3 [shape = 'f32[128,1]{1,0:T(8,128)}', space=vmem, size = 0x10000, scoped, tag = 'scratch operand']
  #allocation4 [shape = 'f32[128,1]{1,0:T(8,128)}', space=vmem, size = 0x10000, scoped, tag = 'scratch operand']
  %s0 = inlined_call_operand.vmem [shape: bf16[128,128], index: 0, kind: input, shape index: {}]
  %s1 = inlined_call_operand.vmem [shape: bf16[128,128], index: 1, kind: input, shape index: {}]
  %s2 = inlined_call_operand.vmem [shape: f32[128,1], index: 2, kind: input, shape index: {}]
  %s3 = inlined_call_operand.vmem [shape: f32[128,1], index: 3, kind: output, shape index: {}]
  %s4 = sld [smem:[#allocation0]]
  $region30: #{tpu_custom_call.1} parent=0
    _
  %s6 = ssub.s32 1, %s4
  %s7 = scalar_select 0, %s6, %s4
  // Predicated region
  $region2: #{tpu_custom_call.1} parent=0 // pred_check
    _
  $region3: #{tpu_custom_call.1} parent=0 // pred_check_branch
    %9 = sbr.rel (0) target = $region5
  $region4: #{tpu_custom_call.1} parent=0 // pred_region
    _
  $region5: #{tpu_custom_call.1} parent=0 // pred_fallthru
    _
  // Predicated region
  $region6: #{tpu_custom_call.1} parent=0 // pred_check
    _
  $region7: #{tpu_custom_call.1} parent=0 // pred_check_branch
    %11 = sbr.rel (0) target = $region9
  $region8: #{tpu_custom_call.1} parent=0 // pred_region
    _
  $region9: #{tpu_custom_call.1} parent=0 // pred_fallthru
    _
  // Predicated region
  $region10: #{tpu_custom_call.1} parent=0 // pred_check
    _
  $region11: #{tpu_custom_call.1} parent=0 // pred_check_branch
    %13 = sbr.rel (0) target = $region13
  $region12: #{tpu_custom_call.1} parent=0 // pred_region
    _
  $region13: #{tpu_custom_call.1} parent=0 // pred_fallthru
    _
  %p15 = scmp.eq.s32.totalorder 0, 0
  // Predicated region
  $region14: #{tpu_custom_call.1} parent=0 // pred_check
    %p16 = pneg %p15
  $region15: #{tpu_custom_call.1} parent=0 // pred_check_branch
    %18 = sbr.rel (%p16) target = $region17
  $region16: #{tpu_custom_call.1} parent=0 // pred_region
    %v19 = vld [vmem:[%s0] sm:$0xf]
    %v20 = vld [vmem:[%s0 + $0x4] sm:$0xf]
    %v21 = vld [vmem:[%s0 + $0x8] sm:$0xf]
    %v22 = vld [vmem:[%s0 + $0xc] sm:$0xf]
    %v23 = vld [vmem:[%s0 + $0x10] sm:$0xf]
    %v24 = vld [vmem:[%s0 + $0x14] sm:$0xf]
    %v25 = vld [vmem:[%s0 + $0x18] sm:$0xf]
    %v26 = vld [vmem:[%s0 + $0x1c] sm:$0xf]
    %v27 = vld [vmem:[%s0 + $0x20] sm:$0xf]
    %v28 = vld [vmem:[%s0 + $0x24] sm:$0xf]
    %v29 = vld [vmem:[%s0 + $0x28] sm:$0xf]
    %v30 = vld [vmem:[%s0 + $0x2c] sm:$0xf]
    %v31 = vld [vmem:[%s0 + $0x30] sm:$0xf]
    %v32 = vld [vmem:[%s0 + $0x34] sm:$0xf]
    %v33 = vld [vmem:[%s0 + $0x38] sm:$0xf]
    %v34 = vld [vmem:[%s0 + $0x3c] sm:$0xf]
    %v35 = vunpack.c.l.bf16 %v19
    %v36 = vunpack.c.l.bf16 %v20
    %v37 = vunpack.c.l.bf16 %v21
    %v38 = vunpack.c.l.bf16 %v22
    %v39 = vunpack.c.l.bf16 %v23
    %v40 = vunpack.c.l.bf16 %v24
    %v41 = vunpack.c.l.bf16 %v25
    %v42 = vunpack.c.l.bf16 %v26
    %v43 = vunpack.c.l.bf16 %v27
    %v44 = vunpack.c.l.bf16 %v28
    %v45 = vunpack.c.l.bf16 %v29
    %v46 = vunpack.c.l.bf16 %v30
    %v47 = vunpack.c.l.bf16 %v31
    %v48 = vunpack.c.l.bf16 %v32
    %v49 = vunpack.c.l.bf16 %v33
    %v50 = vunpack.c.l.bf16 %v34
    %v51 = vmul.f32 %v35, %v35
    %v52 = vmul.f32 %v36, %v36
    %v53 = vmul.f32 %v37, %v37
    %v54 = vmul.f32 %v38, %v38
    %v55 = vmul.f32 %v39, %v39
    %v56 = vmul.f32 %v40, %v40
    %v57 = vmul.f32 %v41, %v41
    %v58 = vmul.f32 %v42, %v42
    %v59 = vmul.f32 %v43, %v43
    %v60 = vmul.f32 %v44, %v44
    %v61 = vmul.f32 %v45, %v45
    %v62 = vmul.f32 %v46, %v46
    %v63 = vmul.f32 %v47, %v47
    %v64 = vmul.f32 %v48, %v48
    %v65 = vmul.f32 %v49, %v49
    %v66 = vmul.f32 %v50, %v50
    %67 = vadd.xlane.f32.xlu0 %v51
    %v68 = vpop.xlane.xlu0 %67
    %69 = vadd.xlane.f32.xlu0 %v52
    %v70 = vpop.xlane.xlu0 %69
    %71 = vadd.xlane.f32.xlu0 %v53
    %v72 = vpop.xlane.xlu0 %71
    %73 = vadd.xlane.f32.xlu0 %v54
    %v74 = vpop.xlane.xlu0 %73
    %75 = vadd.xlane.f32.xlu0 %v55
    %v76 = vpop.xlane.xlu0 %75
    %77 = vadd.xlane.f32.xlu0 %v56
    %v78 = vpop.xlane.xlu0 %77
    %79 = vadd.xlane.f32.xlu0 %v57
    %v80 = vpop.xlane.xlu0 %79
    %81 = vadd.xlane.f32.xlu0 %v58
    %v82 = vpop.xlane.xlu0 %81
    %83 = vadd.xlane.f32.xlu0 %v59
    %v84 = vpop.xlane.xlu0 %83
    %85 = vadd.xlane.f32.xlu0 %v60
    %v86 = vpop.xlane.xlu0 %85
    %87 = vadd.xlane.f32.xlu0 %v61
    %v88 = vpop.xlane.xlu0 %87
    %89 = vadd.xlane.f32.xlu0 %v62
    %v90 = vpop.xlane.xlu0 %89
    %91 = vadd.xlane.f32.xlu0 %v63
    %v92 = vpop.xlane.xlu0 %91
    %93 = vadd.xlane.f32.xlu0 %v64
    %v94 = vpop.xlane.xlu0 %93
    %95 = vadd.xlane.f32.xlu0 %v65
    %v96 = vpop.xlane.xlu0 %95
    %97 = vadd.xlane.f32.xlu0 %v66
    %v98 = vpop.xlane.xlu0 %97
    %vm99 = vcmask 7168
    %100 = vst.msk [vmem:[#allocation4] sm:$0xff] %vm99, %v68
    %101 = vst.msk [vmem:[#allocation4 + $0x8] sm:$0xff] %vm99, %v70
    %102 = vst.msk [vmem:[#allocation4 + $0x10] sm:$0xff] %vm99, %v72
    %103 = vst.msk [vmem:[#allocation4 + $0x18] sm:$0xff] %vm99, %v74
    %104 = vst.msk [vmem:[#allocation4 + $0x20] sm:$0xff] %vm99, %v76
    %105 = vst.msk [vmem:[#allocation4 + $0x28] sm:$0xff] %vm99, %v78
    %106 = vst.msk [vmem:[#allocation4 + $0x30] sm:$0xff] %vm99, %v80
    %107 = vst.msk [vmem:[#allocation4 + $0x38] sm:$0xff] %vm99, %v82
    %108 = vst.msk [vmem:[#allocation4 + $0x40] sm:$0xff] %vm99, %v84
    %109 = vst.msk [vmem:[#allocation4 + $0x48] sm:$0xff] %vm99, %v86
    %110 = vst.msk [vmem:[#allocation4 + $0x50] sm:$0xff] %vm99, %v88
    %111 = vst.msk [vmem:[#allocation4 + $0x58] sm:$0xff] %vm99, %v90
    %112 = vst.msk [vmem:[#allocation4 + $0x60] sm:$0xff] %vm99, %v92
    %113 = vst.msk [vmem:[#allocation4 + $0x68] sm:$0xff] %vm99, %v94
    %114 = vst.msk [vmem:[#allocation4 + $0x70] sm:$0xff] %vm99, %v96
    %115 = vst.msk [vmem:[#allocation4 + $0x78] sm:$0xff] %vm99, %v98
    %116 = vst.msk [vmem:[#allocation2] sm:$0xff] %vm99, %v68
    %117 = vst.msk [vmem:[#allocation2 + $0x8] sm:$0xff] %vm99, %v70
    %118 = vst.msk [vmem:[#allocation2 + $0x10] sm:$0xff] %vm99, %v72
    %119 = vst.msk [vmem:[#allocation2 + $0x18] sm:$0xff] %vm99, %v74
    %120 = vst.msk [vmem:[#allocation2 + $0x20] sm:$0xff] %vm99, %v76
    %121 = vst.msk [vmem:[#allocation2 + $0x28] sm:$0xff] %vm99, %v78
    %122 = vst.msk [vmem:[#allocation2 + $0x30] sm:$0xff] %vm99, %v80
    %123 = vst.msk [vmem:[#allocation2 + $0x38] sm:$0xff] %vm99, %v82
    %124 = vst.msk [vmem:[#allocation2 + $0x40] sm:$0xff] %vm99, %v84
    %125 = vst.msk [vmem:[#allocation2 + $0x48] sm:$0xff] %vm99, %v86
    %126 = vst.msk [vmem:[#allocation2 + $0x50] sm:$0xff] %vm99, %v88
    %127 = vst.msk [vmem:[#allocation2 + $0x58] sm:$0xff] %vm99, %v90
    %128 = vst.msk [vmem:[#allocation2 + $0x60] sm:$0xff] %vm99, %v92
    %129 = vst.msk [vmem:[#allocation2 + $0x68] sm:$0xff] %vm99, %v94
    %130 = vst.msk [vmem:[#allocation2 + $0x70] sm:$0xff] %vm99, %v96
    %131 = vst.msk [vmem:[#allocation2 + $0x78] sm:$0xff] %vm99, %v98
    %132 = vst.msk [vmem:[#allocation3] sm:$0xff] %vm99, 0.0
    %133 = vst.msk [vmem:[#allocation3 + $0x8] sm:$0xff] %vm99, 0.0
    %134 = vst.msk [vmem:[#allocation3 + $0x10] sm:$0xff] %vm99, 0.0
    %135 = vst.msk [vmem:[#allocation3 + $0x18] sm:$0xff] %vm99, 0.0
    %136 = vst.msk [vmem:[#allocation3 + $0x20] sm:$0xff] %vm99, 0.0
    %137 = vst.msk [vmem:[#allocation3 + $0x28] sm:$0xff] %vm99, 0.0
    %138 = vst.msk [vmem:[#allocation3 + $0x30] sm:$0xff] %vm99, 0.0
    %139 = vst.msk [vmem:[#allocation3 + $0x38] sm:$0xff] %vm99, 0.0
    %140 = vst.msk [vmem:[#allocation3 + $0x40] sm:$0xff] %vm99, 0.0
    %141 = vst.msk [vmem:[#allocation3 + $0x48] sm:$0xff] %vm99, 0.0
    %142 = vst.msk [vmem:[#allocation3 + $0x50] sm:$0xff] %vm99, 0.0
    %143 = vst.msk [vmem:[#allocation3 + $0x58] sm:$0xff] %vm99, 0.0
    %144 = vst.msk [vmem:[#allocation3 + $0x60] sm:$0xff] %vm99, 0.0
    %145 = vst.msk [vmem:[#allocation3 + $0x68] sm:$0xff] %vm99, 0.0
    %146 = vst.msk [vmem:[#allocation3 + $0x70] sm:$0xff] %vm99, 0.0
    %147 = vst.msk [vmem:[#allocation3 + $0x78] sm:$0xff] %vm99, 0.0
  $region17: #{tpu_custom_call.1} parent=0 // pred_fallthru
    _
  %v148 = vld [vmem:[%s0] sm:$0xf]
  %v149 = vld [vmem:[%s0 + $0x4] sm:$0xf]
  %v150 = vld [vmem:[%s0 + $0x8] sm:$0xf]
  %v151 = vld [vmem:[%s0 + $0xc] sm:$0xf]
  %v152 = vld [vmem:[%s0 + $0x10] sm:$0xf]
  %v153 = vld [vmem:[%s0 + $0x14] sm:$0xf]
  %v154 = vld [vmem:[%s0 + $0x18] sm:$0xf]
  %v155 = vld [vmem:[%s0 + $0x1c] sm:$0xf]
  %v156 = vld [vmem:[%s0 + $0x20] sm:$0xf]
  %v157 = vld [vmem:[%s0 + $0x24] sm:$0xf]
  %v158 = vld [vmem:[%s0 + $0x28] sm:$0xf]
  %v159 = vld [vmem:[%s0 + $0x2c] sm:$0xf]
  %v160 = vld [vmem:[%s0 + $0x30] sm:$0xf]
  %v161 = vld [vmem:[%s0 + $0x34] sm:$0xf]
  %v162 = vld [vmem:[%s0 + $0x38] sm:$0xf]
  %v163 = vld [vmem:[%s0 + $0x3c] sm:$0xf]
  %v164 = vld [vmem:[%s1] sm:$0xf]
  %v165 = vld [vmem:[%s1 + $0x4] sm:$0xf]
  %v166 = vld [vmem:[%s1 + $0x8] sm:$0xf]
  %v167 = vld [vmem:[%s1 + $0xc] sm:$0xf]
  %v168 = vld [vmem:[%s1 + $0x10] sm:$0xf]
  %v169 = vld [vmem:[%s1 + $0x14] sm:$0xf]
  %v170 = vld [vmem:[%s1 + $0x18] sm:$0xf]
  %v171 = vld [vmem:[%s1 + $0x1c] sm:$0xf]
  %v172 = vld [vmem:[%s1 + $0x20] sm:$0xf]
  %v173 = vld [vmem:[%s1 + $0x24] sm:$0xf]
  %v174 = vld [vmem:[%s1 + $0x28] sm:$0xf]
  %v175 = vld [vmem:[%s1 + $0x2c] sm:$0xf]
  %v176 = vld [vmem:[%s1 + $0x30] sm:$0xf]
  %v177 = vld [vmem:[%s1 + $0x34] sm:$0xf]
  %v178 = vld [vmem:[%s1 + $0x38] sm:$0xf]
  %v179 = vld [vmem:[%s1 + $0x3c] sm:$0xf]
  %v196 = vunpack.c.l.b16 %v148
  %v197 = vunpack.c.l.b16 %v149
  %v198 = vunpack.c.l.b16 %v150
  %v199 = vunpack.c.l.b16 %v151
  %v200 = vunpack.c.l.b16 %v152
  %v201 = vunpack.c.l.b16 %v153
  %v202 = vunpack.c.l.b16 %v154
  %v203 = vunpack.c.l.b16 %v155
  %v204 = vunpack.c.l.b16 %v156
  %v205 = vunpack.c.l.b16 %v157
  %v206 = vunpack.c.l.b16 %v158
  %v207 = vunpack.c.l.b16 %v159
  %v208 = vunpack.c.l.b16 %v160
  %v209 = vunpack.c.l.b16 %v161
  %v210 = vunpack.c.l.b16 %v162
  %v211 = vunpack.c.l.b16 %v163
  %v212 = vpack.c.b16 %v197, %v196
  %v213 = vpack.c.b16 %v199, %v198
  %v214 = vpack.c.b16 %v201, %v200
  %v215 = vpack.c.b16 %v203, %v202
  %v216 = vpack.c.b16 %v205, %v204
  %v217 = vpack.c.b16 %v207, %v206
  %v218 = vpack.c.b16 %v209, %v208
  %v219 = vpack.c.b16 %v211, %v210
  %v244 = vunpack.c.l.b16 %v164
  %v245 = vunpack.c.l.b16 %v165
  %v246 = vunpack.c.l.b16 %v166
  %v247 = vunpack.c.l.b16 %v167
  %v248 = vunpack.c.l.b16 %v168
  %v249 = vunpack.c.l.b16 %v169
  %v250 = vunpack.c.l.b16 %v170
  %v251 = vunpack.c.l.b16 %v171
  %v252 = vunpack.c.l.b16 %v172
  %v253 = vunpack.c.l.b16 %v173
  %v254 = vunpack.c.l.b16 %v174
  %v255 = vunpack.c.l.b16 %v175
  %v256 = vunpack.c.l.b16 %v176
  %v257 = vunpack.c.l.b16 %v177
  %v258 = vunpack.c.l.b16 %v178
  %v259 = vunpack.c.l.b16 %v179
  %v260 = vpack.c.b16 %v245, %v244
  %v261 = vpack.c.b16 %v247, %v246
  %v262 = vpack.c.b16 %v249, %v248
  %v263 = vpack.c.b16 %v251, %v250
  %v264 = vpack.c.b16 %v253, %v252
  %v265 = vpack.c.b16 %v255, %v254
  %v266 = vpack.c.b16 %v257, %v256
  %v267 = vpack.c.b16 %v259, %v258
  %276 = vmatprep.subr.bf16.mxu0 0
  %277 = vmatpush1.bf16.xpose.msra.mxu0 %v267
  %278 = vmatprep.subr.bf16.mxu0 0
  %279 = vmatpush1.bf16.xpose.msra.mxu0 %v266
  %280 = vmatprep.subr.bf16.mxu0 0
  %281 = vmatpush1.bf16.xpose.msra.mxu0 %v265
  %282 = vmatprep.subr.bf16.mxu0 0
  %283 = vmatpush1.bf16.xpose.msra.mxu0 %v264
  %284 = vmatprep.subr.bf16.mxu0 0
  %285 = vmatpush1.bf16.xpose.msra.mxu0 %v263
  %286 = vmatprep.subr.bf16.mxu0 0
  %287 = vmatpush1.bf16.xpose.msra.mxu0 %v262
  %288 = vmatprep.subr.bf16.mxu0 0
  %289 = vmatpush1.bf16.xpose.msra.mxu0 %v261
  %290 = vmatprep.subr.bf16.mxu0 0
  %291 = vmatpush1.bf16.xpose.msra.mxu0 %v260
  %292 = vmatprep.subr.bf16.mxu0 0
  %293 = vmatpush2.bf16.xpose.msra.mxu0 0
  %294 = vmatprep.subr.bf16.mxu0 0
  %295 = vmatpush2.bf16.xpose.msra.mxu0 0
  %296 = vmatprep.subr.bf16.mxu0 0
  %297 = vmatpush2.bf16.xpose.msra.mxu0 0
  %298 = vmatprep.subr.bf16.mxu0 0
  %299 = vmatpush2.bf16.xpose.msra.mxu0 0
  %300 = vmatprep.subr.bf16.mxu0 0
  %301 = vmatpush2.bf16.xpose.msra.mxu0 0
  %302 = vmatprep.subr.bf16.mxu0 0
  %303 = vmatpush2.bf16.xpose.msra.mxu0 0
  %304 = vmatprep.subr.bf16.mxu0 0
  %305 = vmatpush2.bf16.xpose.msra.mxu0 0
  %306 = vmatprep.subr.bf16.mxu0 0
  %307 = vmatpush2.bf16.xpose.msra.mxu0 0
  %308 = vmatprep.mubr.bf16.mxu0 0
  %309 = vmatmul.mubr.bf16.gmra.mxu0 %v212
  %v310 = vpop.f32.mrf.mxu0
  %v311 = vadd.f32 0.0, %v310
  %v312 = vpop.f32.mrf.mxu0
  %v313 = vpop.f32.mrf.mxu0
  %v314 = vadd.f32 0.0, %v313
  %v315 = vpop.f32.mrf.mxu0
  %316 = vmatprep.mubr.bf16.mxu0 0
  %317 = vmatmul.mubr.bf16.gmra.mxu0 %v213
  %v318 = vpop.f32.mrf.mxu0
  %v319 = vadd.f32 0.0, %v318
  %v320 = vpop.f32.mrf.mxu0
  %v321 = vpop.f32.mrf.mxu0
  %v322 = vadd.f32 0.0, %v321
  %v323 = vpop.f32.mrf.mxu0
  %324 = vmatprep.mubr.bf16.mxu0 0
  %325 = vmatmul.mubr.bf16.gmra.mxu0 %v214
  %v326 = vpop.f32.mrf.mxu0
  %v327 = vadd.f32 0.0, %v326
  %v328 = vpop.f32.mrf.mxu0
  %v329 = vpop.f32.mrf.mxu0
  %v330 = vadd.f32 0.0, %v329
  %v331 = vpop.f32.mrf.mxu0
  %332 = vmatprep.mubr.bf16.mxu0 0
  %333 = vmatmul.mubr.bf16.gmra.mxu0 %v215
  %v334 = vpop.f32.mrf.mxu0
  %v335 = vadd.f32 0.0, %v334
  %v336 = vpop.f32.mrf.mxu0
  %v337 = vpop.f32.mrf.mxu0
  %v338 = vadd.f32 0.0, %v337
  %v339 = vpop.f32.mrf.mxu0
  %340 = vmatprep.mubr.bf16.mxu0 0
  %341 = vmatmul.mubr.bf16.gmra.mxu0 %v216
  %v342 = vpop.f32.mrf.mxu0
  %v343 = vadd.f32 0.0, %v342
  %v344 = vpop.f32.mrf.mxu0
  %v345 = vpop.f32.mrf.mxu0
  %v346 = vadd.f32 0.0, %v345
  %v347 = vpop.f32.mrf.mxu0
  %348 = vmatprep.mubr.bf16.mxu0 0
  %349 = vmatmul.mubr.bf16.gmra.mxu0 %v217
  %v350 = vpop.f32.mrf.mxu0
  %v351 = vadd.f32 0.0, %v350
  %v352 = vpop.f32.mrf.mxu0
  %v353 = vpop.f32.mrf.mxu0
  %v354 = vadd.f32 0.0, %v353
  %v355 = vpop.f32.mrf.mxu0
  %356 = vmatprep.mubr.bf16.mxu0 0
  %357 = vmatmul.mubr.bf16.gmra.mxu0 %v218
  %v358 = vpop.f32.mrf.mxu0
  %v359 = vadd.f32 0.0, %v358
  %v360 = vpop.f32.mrf.mxu0
  %v361 = vpop.f32.mrf.mxu0
  %v362 = vadd.f32 0.0, %v361
  %v363 = vpop.f32.mrf.mxu0
  %364 = vmatprep.mubr.bf16.mxu0 0
  %365 = vmatmul.mubr.bf16.gmra.mxu0 %v219
  %v366 = vpop.f32.mrf.mxu0
  %v367 = vadd.f32 0.0, %v366
  %v368 = vpop.f32.mrf.mxu0
  %v369 = vpop.f32.mrf.mxu0
  %v370 = vadd.f32 0.0, %v369
  %v371 = vpop.f32.mrf.mxu0
  %372 = vdwg.mxu0
  %s373 = smul.u32 0, 128
  %v374 = vlaneseq
  %v375 = vand.u32 %v374, 127
  %v376 = vstv %s373
  %v377 = vadd.s32 %v376, %v375
  %vm378 = vcmp.ge.s32.totalorder %v377, 8
  %v379 = vsel %vm378, 1, 0
  %vm380 = vcmp.eq.s32.totalorder %v379, 1
  %v381 = vsel %vm380, -1e+30, %v311
  %v382 = vsel %vm380, -1e+30, %v314
  %v383 = vsel %vm380, -1e+30, %v319
  %v384 = vsel %vm380, -1e+30, %v322
  %v385 = vsel %vm380, -1e+30, %v327
  %v386 = vsel %vm380, -1e+30, %v330
  %v387 = vsel %vm380, -1e+30, %v335
  %v388 = vsel %vm380, -1e+30, %v338
  %v389 = vsel %vm380, -1e+30, %v343
  %v390 = vsel %vm380, -1e+30, %v346
  %v391 = vsel %vm380, -1e+30, %v351
  %v392 = vsel %vm380, -1e+30, %v354
  %v393 = vsel %vm380, -1e+30, %v359
  %v394 = vsel %vm380, -1e+30, %v362
  %v395 = vsel %vm380, -1e+30, %v367
  %v396 = vsel %vm380, -1e+30, %v370
  %v397 = vld [vmem:[#allocation2] sm:$0xff]
  %v398 = vld [vmem:[#allocation2 + $0x8] sm:$0xff]
  %v399 = vld [vmem:[#allocation2 + $0x10] sm:$0xff]
  %v400 = vld [vmem:[#allocation2 + $0x18] sm:$0xff]
  %v401 = vld [vmem:[#allocation2 + $0x20] sm:$0xff]
  %v402 = vld [vmem:[#allocation2 + $0x28] sm:$0xff]
  %v403 = vld [vmem:[#allocation2 + $0x30] sm:$0xff]
  %v404 = vld [vmem:[#allocation2 + $0x38] sm:$0xff]
  %v405 = vld [vmem:[#allocation2 + $0x40] sm:$0xff]
  %v406 = vld [vmem:[#allocation2 + $0x48] sm:$0xff]
  %v407 = vld [vmem:[#allocation2 + $0x50] sm:$0xff]
  %v408 = vld [vmem:[#allocation2 + $0x58] sm:$0xff]
  %v409 = vld [vmem:[#allocation2 + $0x60] sm:$0xff]
  %v410 = vld [vmem:[#allocation2 + $0x68] sm:$0xff]
  %v411 = vld [vmem:[#allocation2 + $0x70] sm:$0xff]
  %v412 = vld [vmem:[#allocation2 + $0x78] sm:$0xff]
  %413 = vmax.xlane.f32.xlu0 %v381
  %v414 = vpop.xlane.xlu0 %413
  %415 = vmax.xlane.f32.xlu0 %v382
  %v416 = vpop.xlane.xlu0 %415
  %417 = vmax.xlane.f32.xlu0 %v383
  %v418 = vpop.xlane.xlu0 %417
  %419 = vmax.xlane.f32.xlu0 %v384
  %v420 = vpop.xlane.xlu0 %419
  %421 = vmax.xlane.f32.xlu0 %v385
  %v422 = vpop.xlane.xlu0 %421
  %423 = vmax.xlane.f32.xlu0 %v386
  %v424 = vpop.xlane.xlu0 %423
  %425 = vmax.xlane.f32.xlu0 %v387
  %v426 = vpop.xlane.xlu0 %425
  %427 = vmax.xlane.f32.xlu0 %v388
  %v428 = vpop.xlane.xlu0 %427
  %429 = vmax.xlane.f32.xlu0 %v389
  %v430 = vpop.xlane.xlu0 %429
  %431 = vmax.xlane.f32.xlu0 %v390
  %v432 = vpop.xlane.xlu0 %431
  %433 = vmax.xlane.f32.xlu0 %v391
  %v434 = vpop.xlane.xlu0 %433
  %435 = vmax.xlane.f32.xlu0 %v392
  %v436 = vpop.xlane.xlu0 %435
  %437 = vmax.xlane.f32.xlu0 %v393
  %v438 = vpop.xlane.xlu0 %437
  %439 = vmax.xlane.f32.xlu0 %v394
  %v440 = vpop.xlane.xlu0 %439
  %441 = vmax.xlane.f32.xlu0 %v395
  %v442 = vpop.xlane.xlu0 %441
  %443 = vmax.xlane.f32.xlu0 %v396
  %v444 = vpop.xlane.xlu0 %443
  %v445 = vmax.f32 %v397, %v414
  %v446 = vmax.f32 %v398, %v416
  %v447 = vmax.f32 %v399, %v418
  %v448 = vmax.f32 %v400, %v420
  %v449 = vmax.f32 %v401, %v422
  %v450 = vmax.f32 %v402, %v424
  %v451 = vmax.f32 %v403, %v426
  %v452 = vmax.f32 %v404, %v428
  %v453 = vmax.f32 %v405, %v430
  %v454 = vmax.f32 %v406, %v432
  %v455 = vmax.f32 %v407, %v434
  %v456 = vmax.f32 %v408, %v436
  %v457 = vmax.f32 %v409, %v438
  %v458 = vmax.f32 %v410, %v440
  %v459 = vmax.f32 %v411, %v442
  %v460 = vmax.f32 %v412, %v444
  %462 = vset.pattern.permute.xlu0 0
  %463 = vperm.xlu0 %462, %v445
  %v464 = vpop.permute.xlu0 %463
  %467 = vset.pattern.permute.xlu0 0
  %468 = vperm.xlu0 %467, %v446
  %v469 = vpop.permute.xlu0 %468
  %472 = vset.pattern.permute.xlu0 0
  %473 = vperm.xlu0 %472, %v447
  %v474 = vpop.permute.xlu0 %473
  %477 = vset.pattern.permute.xlu0 0
  %478 = vperm.xlu0 %477, %v448
  %v479 = vpop.permute.xlu0 %478
  %482 = vset.pattern.permute.xlu0 0
  %483 = vperm.xlu0 %482, %v449
  %v484 = vpop.permute.xlu0 %483
  %487 = vset.pattern.permute.xlu0 0
  %488 = vperm.xlu0 %487, %v450
  %v489 = vpop.permute.xlu0 %488
  %492 = vset.pattern.permute.xlu0 0
  %493 = vperm.xlu0 %492, %v451
  %v494 = vpop.permute.xlu0 %493
  %497 = vset.pattern.permute.xlu0 0
  %498 = vperm.xlu0 %497, %v452
  %v499 = vpop.permute.xlu0 %498
  %502 = vset.pattern.permute.xlu0 0
  %503 = vperm.xlu0 %502, %v453
  %v504 = vpop.permute.xlu0 %503
  %507 = vset.pattern.permute.xlu0 0
  %508 = vperm.xlu0 %507, %v454
  %v509 = vpop.permute.xlu0 %508
  %512 = vset.pattern.permute.xlu0 0
  %513 = vperm.xlu0 %512, %v455
  %v514 = vpop.permute.xlu0 %513
  %517 = vset.pattern.permute.xlu0 0
  %518 = vperm.xlu0 %517, %v456
  %v519 = vpop.permute.xlu0 %518
  %522 = vset.pattern.permute.xlu0 0
  %523 = vperm.xlu0 %522, %v457
  %v524 = vpop.permute.xlu0 %523
  %527 = vset.pattern.permute.xlu0 0
  %528 = vperm.xlu0 %527, %v458
  %v529 = vpop.permute.xlu0 %528
  %532 = vset.pattern.permute.xlu0 0
  %533 = vperm.xlu0 %532, %v459
  %v534 = vpop.permute.xlu0 %533
  %537 = vset.pattern.permute.xlu0 0
  %538 = vperm.xlu0 %537, %v460
  %v539 = vpop.permute.xlu0 %538
  %v541 = vsub.f32 %v381, %v464
  %v542 = vsub.f32 %v382, %v469
  %v543 = vsub.f32 %v383, %v474
  %v544 = vsub.f32 %v384, %v479
  %v545 = vsub.f32 %v385, %v484
  %v546 = vsub.f32 %v386, %v489
  %v547 = vsub.f32 %v387, %v494
  %v548 = vsub.f32 %v388, %v499
  %v549 = vsub.f32 %v389, %v504
  %v550 = vsub.f32 %v390, %v509
  %v551 = vsub.f32 %v391, %v514
  %v552 = vsub.f32 %v392, %v519
  %v553 = vsub.f32 %v393, %v524
  %v554 = vsub.f32 %v394, %v529
  %v555 = vsub.f32 %v395, %v534
  %v556 = vsub.f32 %v396, %v539
  %v557 = vpack.c.bf16 %v542, %v541
  %v558 = vpack.c.bf16 %v544, %v543
  %v559 = vpack.c.bf16 %v546, %v545
  %v560 = vpack.c.bf16 %v548, %v547
  %v561 = vpack.c.bf16 %v550, %v549
  %v562 = vpack.c.bf16 %v552, %v551
  %v563 = vpack.c.bf16 %v554, %v553
  %v564 = vpack.c.bf16 %v556, %v555
  %v566 = vmul.bf16 %v557, 1069105081
  %v567 = vpow.bf16.pop %v566
  %v569 = vmul.bf16 %v558, 1069105081
  %v570 = vpow.bf16.pop %v569
  %v572 = vmul.bf16 %v559, 1069105081
  %v573 = vpow.bf16.pop %v572
  %v575 = vmul.bf16 %v560, 1069105081
  %v576 = vpow.bf16.pop %v575
  %v578 = vmul.bf16 %v561, 1069105081
  %v579 = vpow.bf16.pop %v578
  %v581 = vmul.bf16 %v562, 1069105081
  %v582 = vpow.bf16.pop %v581
  %v584 = vmul.bf16 %v563, 1069105081
  %v585 = vpow.bf16.pop %v584
  %v587 = vmul.bf16 %v564, 1069105081
  %v588 = vpow.bf16.pop %v587
  %v589 = vunpack.c.l.bf16 %v567
  %v590 = vunpack.c.h.bf16 %v567
  %v591 = vunpack.c.l.bf16 %v570
  %v592 = vunpack.c.h.bf16 %v570
  %v593 = vunpack.c.l.bf16 %v573
  %v594 = vunpack.c.h.bf16 %v573
  %v595 = vunpack.c.l.bf16 %v576
  %v596 = vunpack.c.h.bf16 %v576
  %v597 = vunpack.c.l.bf16 %v579
  %v598 = vunpack.c.h.bf16 %v579
  %v599 = vunpack.c.l.bf16 %v582
  %v600 = vunpack.c.h.bf16 %v582
  %v601 = vunpack.c.l.bf16 %v585
  %v602 = vunpack.c.h.bf16 %v585
  %v603 = vunpack.c.l.bf16 %v588
  %v604 = vunpack.c.h.bf16 %v588
  %v605 = vld [vmem:[#allocation3] sm:$0xff]
  %v606 = vld [vmem:[#allocation3 + $0x8] sm:$0xff]
  %v607 = vld [vmem:[#allocation3 + $0x10] sm:$0xff]
  %v608 = vld [vmem:[#allocation3 + $0x18] sm:$0xff]
  %v609 = vld [vmem:[#allocation3 + $0x20] sm:$0xff]
  %v610 = vld [vmem:[#allocation3 + $0x28] sm:$0xff]
  %v611 = vld [vmem:[#allocation3 + $0x30] sm:$0xff]
  %v612 = vld [vmem:[#allocation3 + $0x38] sm:$0xff]
  %v613 = vld [vmem:[#allocation3 + $0x40] sm:$0xff]
  %v614 = vld [vmem:[#allocation3 + $0x48] sm:$0xff]
  %v615 = vld [vmem:[#allocation3 + $0x50] sm:$0xff]
  %v616 = vld [vmem:[#allocation3 + $0x58] sm:$0xff]
  %v617 = vld [vmem:[#allocation3 + $0x60] sm:$0xff]
  %v618 = vld [vmem:[#allocation3 + $0x68] sm:$0xff]
  %v619 = vld [vmem:[#allocation3 + $0x70] sm:$0xff]
  %v620 = vld [vmem:[#allocation3 + $0x78] sm:$0xff]
  %v621 = vsub.f32 %v397, %v445
  %v622 = vsub.f32 %v398, %v446
  %v623 = vsub.f32 %v399, %v447
  %v624 = vsub.f32 %v400, %v448
  %v625 = vsub.f32 %v401, %v449
  %v626 = vsub.f32 %v402, %v450
  %v627 = vsub.f32 %v403, %v451
  %v628 = vsub.f32 %v404, %v452
  %v629 = vsub.f32 %v405, %v453
  %v630 = vsub.f32 %v406, %v454
  %v631 = vsub.f32 %v407, %v455
  %v632 = vsub.f32 %v408, %v456
  %v633 = vsub.f32 %v409, %v457
  %v634 = vsub.f32 %v410, %v458
  %v635 = vsub.f32 %v411, %v459
  %v636 = vsub.f32 %v412, %v460
  %v637 = vmul.f32 %v621, 1.442695
  %v638 = vpow.pop %v637
  %v639 = vmul.f32 %v622, 1.442695
  %v640 = vpow.pop %v639
  %v641 = vmul.f32 %v623, 1.442695
  %v642 = vpow.pop %v641
  %v643 = vmul.f32 %v624, 1.442695
  %v644 = vpow.pop %v643
  %v645 = vmul.f32 %v625, 1.442695
  %v646 = vpow.pop %v645
  %v647 = vmul.f32 %v626, 1.442695
  %v648 = vpow.pop %v647
  %v649 = vmul.f32 %v627, 1.442695
  %v650 = vpow.pop %v649
  %v651 = vmul.f32 %v628, 1.442695
  %v652 = vpow.pop %v651
  %v653 = vmul.f32 %v629, 1.442695
  %v654 = vpow.pop %v653
  %v655 = vmul.f32 %v630, 1.442695
  %v656 = vpow.pop %v655
  %v657 = vmul.f32 %v631, 1.442695
  %v658 = vpow.pop %v657
  %v659 = vmul.f32 %v632, 1.442695
  %v660 = vpow.pop %v659
  %v661 = vmul.f32 %v633, 1.442695
  %v662 = vpow.pop %v661
  %v663 = vmul.f32 %v634, 1.442695
  %v664 = vpow.pop %v663
  %v665 = vmul.f32 %v635, 1.442695
  %v666 = vpow.pop %v665
  %v667 = vmul.f32 %v636, 1.442695
  %v668 = vpow.pop %v667
  %v669 = vmul.f32 %v605, %v638
  %v670 = vmul.f32 %v606, %v640
  %v671 = vmul.f32 %v607, %v642
  %v672 = vmul.f32 %v608, %v644
  %v673 = vmul.f32 %v609, %v646
  %v674 = vmul.f32 %v610, %v648
  %v675 = vmul.f32 %v611, %v650
  %v676 = vmul.f32 %v612, %v652
  %v677 = vmul.f32 %v613, %v654
  %v678 = vmul.f32 %v614, %v656
  %v679 = vmul.f32 %v615, %v658
  %v680 = vmul.f32 %v616, %v660
  %v681 = vmul.f32 %v617, %v662
  %v682 = vmul.f32 %v618, %v664
  %v683 = vmul.f32 %v619, %v666
  %v684 = vmul.f32 %v620, %v668
  %685 = vadd.xlane.f32.xlu0 %v589
  %v686 = vpop.xlane.xlu0 %685
  %687 = vadd.xlane.f32.xlu0 %v590
  %v688 = vpop.xlane.xlu0 %687
  %689 = vadd.xlane.f32.xlu0 %v591
  %v690 = vpop.xlane.xlu0 %689
  %691 = vadd.xlane.f32.xlu0 %v592
  %v692 = vpop.xlane.xlu0 %691
  %693 = vadd.xlane.f32.xlu0 %v593
  %v694 = vpop.xlane.xlu0 %693
  %695 = vadd.xlane.f32.xlu0 %v594
  %v696 = vpop.xlane.xlu0 %695
  %697 = vadd.xlane.f32.xlu0 %v595
  %v698 = vpop.xlane.xlu0 %697
  %699 = vadd.xlane.f32.xlu0 %v596
  %v700 = vpop.xlane.xlu0 %699
  %701 = vadd.xlane.f32.xlu0 %v597
  %v702 = vpop.xlane.xlu0 %701
  %703 = vadd.xlane.f32.xlu0 %v598
  %v704 = vpop.xlane.xlu0 %703
  %705 = vadd.xlane.f32.xlu0 %v599
  %v706 = vpop.xlane.xlu0 %705
  %707 = vadd.xlane.f32.xlu0 %v600
  %v708 = vpop.xlane.xlu0 %707
  %709 = vadd.xlane.f32.xlu0 %v601
  %v710 = vpop.xlane.xlu0 %709
  %711 = vadd.xlane.f32.xlu0 %v602
  %v712 = vpop.xlane.xlu0 %711
  %713 = vadd.xlane.f32.xlu0 %v603
  %v714 = vpop.xlane.xlu0 %713
  %715 = vadd.xlane.f32.xlu0 %v604
  %v716 = vpop.xlane.xlu0 %715
  %v717 = vadd.f32 %v669, %v686
  %v718 = vadd.f32 %v670, %v688
  %v719 = vadd.f32 %v671, %v690
  %v720 = vadd.f32 %v672, %v692
  %v721 = vadd.f32 %v673, %v694
  %v722 = vadd.f32 %v674, %v696
  %v723 = vadd.f32 %v675, %v698
  %v724 = vadd.f32 %v676, %v700
  %v725 = vadd.f32 %v677, %v702
  %v726 = vadd.f32 %v678, %v704
  %v727 = vadd.f32 %v679, %v706
  %v728 = vadd.f32 %v680, %v708
  %v729 = vadd.f32 %v681, %v710
  %v730 = vadd.f32 %v682, %v712
  %v731 = vadd.f32 %v683, %v714
  %v732 = vadd.f32 %v684, %v716
  %vm733 = vcmask 7168
  %734 = vst.msk [vmem:[#allocation3] sm:$0xff] %vm733, %v717
  %735 = vst.msk [vmem:[#allocation3 + $0x8] sm:$0xff] %vm733, %v718
  %736 = vst.msk [vmem:[#allocation3 + $0x10] sm:$0xff] %vm733, %v719
  %737 = vst.msk [vmem:[#allocation3 + $0x18] sm:$0xff] %vm733, %v720
  %738 = vst.msk [vmem:[#allocation3 + $0x20] sm:$0xff] %vm733, %v721
  %739 = vst.msk [vmem:[#allocation3 + $0x28] sm:$0xff] %vm733, %v722
  %740 = vst.msk [vmem:[#allocation3 + $0x30] sm:$0xff] %vm733, %v723
  %741 = vst.msk [vmem:[#allocation3 + $0x38] sm:$0xff] %vm733, %v724
  %742 = vst.msk [vmem:[#allocation3 + $0x40] sm:$0xff] %vm733, %v725
  %743 = vst.msk [vmem:[#allocation3 + $0x48] sm:$0xff] %vm733, %v726
  %744 = vst.msk [vmem:[#allocation3 + $0x50] sm:$0xff] %vm733, %v727
  %745 = vst.msk [vmem:[#allocation3 + $0x58] sm:$0xff] %vm733, %v728
  %746 = vst.msk [vmem:[#allocation3 + $0x60] sm:$0xff] %vm733, %v729
  %747 = vst.msk [vmem:[#allocation3 + $0x68] sm:$0xff] %vm733, %v730
  %748 = vst.msk [vmem:[#allocation3 + $0x70] sm:$0xff] %vm733, %v731
  %749 = vst.msk [vmem:[#allocation3 + $0x78] sm:$0xff] %vm733, %v732
  %750 = vst.msk [vmem:[#allocation2] sm:$0xff] %vm733, %v445
  %751 = vst.msk [vmem:[#allocation2 + $0x8] sm:$0xff] %vm733, %v446
  %752 = vst.msk [vmem:[#allocation2 + $0x10] sm:$0xff] %vm733, %v447
  %753 = vst.msk [vmem:[#allocation2 + $0x18] sm:$0xff] %vm733, %v448
  %754 = vst.msk [vmem:[#allocation2 + $0x20] sm:$0xff] %vm733, %v449
  %755 = vst.msk [vmem:[#allocation2 + $0x28] sm:$0xff] %vm733, %v450
  %756 = vst.msk [vmem:[#allocation2 + $0x30] sm:$0xff] %vm733, %v451
  %757 = vst.msk [vmem:[#allocation2 + $0x38] sm:$0xff] %vm733, %v452
  %758 = vst.msk [vmem:[#allocation2 + $0x40] sm:$0xff] %vm733, %v453
  %759 = vst.msk [vmem:[#allocation2 + $0x48] sm:$0xff] %vm733, %v454
  %760 = vst.msk [vmem:[#allocation2 + $0x50] sm:$0xff] %vm733, %v455
  %761 = vst.msk [vmem:[#allocation2 + $0x58] sm:$0xff] %vm733, %v456
  %762 = vst.msk [vmem:[#allocation2 + $0x60] sm:$0xff] %vm733, %v457
  %763 = vst.msk [vmem:[#allocation2 + $0x68] sm:$0xff] %vm733, %v458
  %764 = vst.msk [vmem:[#allocation2 + $0x70] sm:$0xff] %vm733, %v459
  %765 = vst.msk [vmem:[#allocation2 + $0x78] sm:$0xff] %vm733, %v460
  // Predicated region
  $region18: #{tpu_custom_call.1} parent=0 // pred_check
    %p766 = pneg %p15
  $region19: #{tpu_custom_call.1} parent=0 // pred_check_branch
    %768 = sbr.rel (%p766) target = $region21
  $region20: #{tpu_custom_call.1} parent=0 // pred_region
    %v769 = vld [vmem:[#allocation2] sm:$0xff]
    %v770 = vld [vmem:[#allocation2 + $0x8] sm:$0xff]
    %v771 = vld [vmem:[#allocation2 + $0x10] sm:$0xff]
    %v772 = vld [vmem:[#allocation2 + $0x18] sm:$0xff]
    %v773 = vld [vmem:[#allocation2 + $0x20] sm:$0xff]
    %v774 = vld [vmem:[#allocation2 + $0x28] sm:$0xff]
    %v775 = vld [vmem:[#allocation2 + $0x30] sm:$0xff]
    %v776 = vld [vmem:[#allocation2 + $0x38] sm:$0xff]
    %v777 = vld [vmem:[#allocation2 + $0x40] sm:$0xff]
    %v778 = vld [vmem:[#allocation2 + $0x48] sm:$0xff]
    %v779 = vld [vmem:[#allocation2 + $0x50] sm:$0xff]
    %v780 = vld [vmem:[#allocation2 + $0x58] sm:$0xff]
    %v781 = vld [vmem:[#allocation2 + $0x60] sm:$0xff]
    %v782 = vld [vmem:[#allocation2 + $0x68] sm:$0xff]
    %v783 = vld [vmem:[#allocation2 + $0x70] sm:$0xff]
    %v784 = vld [vmem:[#allocation2 + $0x78] sm:$0xff]
    %v785 = vld [vmem:[#allocation4] sm:$0xff]
    %v786 = vld [vmem:[#allocation4 + $0x8] sm:$0xff]
    %v787 = vld [vmem:[#allocation4 + $0x10] sm:$0xff]
    %v788 = vld [vmem:[#allocation4 + $0x18] sm:$0xff]
    %v789 = vld [vmem:[#allocation4 + $0x20] sm:$0xff]
    %v790 = vld [vmem:[#allocation4 + $0x28] sm:$0xff]
    %v791 = vld [vmem:[#allocation4 + $0x30] sm:$0xff]
    %v792 = vld [vmem:[#allocation4 + $0x38] sm:$0xff]
    %v793 = vld [vmem:[#allocation4 + $0x40] sm:$0xff]
    %v794 = vld [vmem:[#allocation4 + $0x48] sm:$0xff]
    %v795 = vld [vmem:[#allocation4 + $0x50] sm:$0xff]
    %v796 = vld [vmem:[#allocation4 + $0x58] sm:$0xff]
    %v797 = vld [vmem:[#allocation4 + $0x60] sm:$0xff]
    %v798 = vld [vmem:[#allocation4 + $0x68] sm:$0xff]
    %v799 = vld [vmem:[#allocation4 + $0x70] sm:$0xff]
    %v800 = vld [vmem:[#allocation4 + $0x78] sm:$0xff]
    %v801 = vsub.f32 %v785, %v769
    %v802 = vsub.f32 %v786, %v770
    %v803 = vsub.f32 %v787, %v771
    %v804 = vsub.f32 %v788, %v772
    %v805 = vsub.f32 %v789, %v773
    %v806 = vsub.f32 %v790, %v774
    %v807 = vsub.f32 %v791, %v775
    %v808 = vsub.f32 %v792, %v776
    %v809 = vsub.f32 %v793, %v777
    %v810 = vsub.f32 %v794, %v778
    %v811 = vsub.f32 %v795, %v779
    %v812 = vsub.f32 %v796, %v780
    %v813 = vsub.f32 %v797, %v781
    %v814 = vsub.f32 %v798, %v782
    %v815 = vsub.f32 %v799, %v783
    %v816 = vsub.f32 %v800, %v784
    %v817 = vpack.c.bf16 %v802, %v801
    %v818 = vpack.c.bf16 %v804, %v803
    %v819 = vpack.c.bf16 %v806, %v805
    %v820 = vpack.c.bf16 %v808, %v807
    %v821 = vpack.c.bf16 %v810, %v809
    %v822 = vpack.c.bf16 %v812, %v811
    %v823 = vpack.c.bf16 %v814, %v813
    %v824 = vpack.c.bf16 %v816, %v815
    %v826 = vmul.bf16 %v817, 1069105081
    %v827 = vpow.bf16.pop %v826
    %v829 = vmul.bf16 %v818, 1069105081
    %v830 = vpow.bf16.pop %v829
    %v832 = vmul.bf16 %v819, 1069105081
    %v833 = vpow.bf16.pop %v832
    %v835 = vmul.bf16 %v820, 1069105081
    %v836 = vpow.bf16.pop %v835
    %v838 = vmul.bf16 %v821, 1069105081
    %v839 = vpow.bf16.pop %v838
    %v841 = vmul.bf16 %v822, 1069105081
    %v842 = vpow.bf16.pop %v841
    %v844 = vmul.bf16 %v823, 1069105081
    %v845 = vpow.bf16.pop %v844
    %v847 = vmul.bf16 %v824, 1069105081
    %v848 = vpow.bf16.pop %v847
    %v849 = vunpack.c.l.bf16 %v827
    %v850 = vunpack.c.h.bf16 %v827
    %v851 = vunpack.c.l.bf16 %v830
    %v852 = vunpack.c.h.bf16 %v830
    %v853 = vunpack.c.l.bf16 %v833
    %v854 = vunpack.c.h.bf16 %v833
    %v855 = vunpack.c.l.bf16 %v836
    %v856 = vunpack.c.h.bf16 %v836
    %v857 = vunpack.c.l.bf16 %v839
    %v858 = vunpack.c.h.bf16 %v839
    %v859 = vunpack.c.l.bf16 %v842
    %v860 = vunpack.c.h.bf16 %v842
    %v861 = vunpack.c.l.bf16 %v845
    %v862 = vunpack.c.h.bf16 %v845
    %v863 = vunpack.c.l.bf16 %v848
    %v864 = vunpack.c.h.bf16 %v848
    %v865 = vld [vmem:[#allocation3] sm:$0xff]
    %v866 = vld [vmem:[#allocation3 + $0x8] sm:$0xff]
    %v867 = vld [vmem:[#allocation3 + $0x10] sm:$0xff]
    %v868 = vld [vmem:[#allocation3 + $0x18] sm:$0xff]
    %v869 = vld [vmem:[#allocation3 + $0x20] sm:$0xff]
    %v870 = vld [vmem:[#allocation3 + $0x28] sm:$0xff]
    %v871 = vld [vmem:[#allocation3 + $0x30] sm:$0xff]
    %v872 = vld [vmem:[#allocation3 + $0x38] sm:$0xff]
    %v873 = vld [vmem:[#allocation3 + $0x40] sm:$0xff]
    %v874 = vld [vmem:[#allocation3 + $0x48] sm:$0xff]
    %v875 = vld [vmem:[#allocation3 + $0x50] sm:$0xff]
    %v876 = vld [vmem:[#allocation3 + $0x58] sm:$0xff]
    %v877 = vld [vmem:[#allocation3 + $0x60] sm:$0xff]
    %v878 = vld [vmem:[#allocation3 + $0x68] sm:$0xff]
    %v879 = vld [vmem:[#allocation3 + $0x70] sm:$0xff]
    %v880 = vld [vmem:[#allocation3 + $0x78] sm:$0xff]
    %v881 = vsub.f32 %v865, %v849
    %v882 = vsub.f32 %v866, %v850
    %v883 = vsub.f32 %v867, %v851
    %v884 = vsub.f32 %v868, %v852
    %v885 = vsub.f32 %v869, %v853
    %v886 = vsub.f32 %v870, %v854
    %v887 = vsub.f32 %v871, %v855
    %v888 = vsub.f32 %v872, %v856
    %v889 = vsub.f32 %v873, %v857
    %v890 = vsub.f32 %v874, %v858
    %v891 = vsub.f32 %v875, %v859
    %v892 = vsub.f32 %v876, %v860
    %v893 = vsub.f32 %v877, %v861
    %v894 = vsub.f32 %v878, %v862
    %v895 = vsub.f32 %v879, %v863
    %v896 = vsub.f32 %v880, %v864
    %v897 = vlog2.pop %v881
    %v898 = vmul.f32 %v897, 0.6931472
    %v899 = vlog2.pop %v882
    %v900 = vmul.f32 %v899, 0.6931472
    %v901 = vlog2.pop %v883
    %v902 = vmul.f32 %v901, 0.6931472
    %v903 = vlog2.pop %v884
    %v904 = vmul.f32 %v903, 0.6931472
    %v905 = vlog2.pop %v885
    %v906 = vmul.f32 %v905, 0.6931472
    %v907 = vlog2.pop %v886
    %v908 = vmul.f32 %v907, 0.6931472
    %v909 = vlog2.pop %v887
    %v910 = vmul.f32 %v909, 0.6931472
    %v911 = vlog2.pop %v888
    %v912 = vmul.f32 %v911, 0.6931472
    %v913 = vlog2.pop %v889
    %v914 = vmul.f32 %v913, 0.6931472
    %v915 = vlog2.pop %v890
    %v916 = vmul.f32 %v915, 0.6931472
    %v917 = vlog2.pop %v891
    %v918 = vmul.f32 %v917, 0.6931472
    %v919 = vlog2.pop %v892
    %v920 = vmul.f32 %v919, 0.6931472
    %v921 = vlog2.pop %v893
    %v922 = vmul.f32 %v921, 0.6931472
    %v923 = vlog2.pop %v894
    %v924 = vmul.f32 %v923, 0.6931472
    %v925 = vlog2.pop %v895
    %v926 = vmul.f32 %v925, 0.6931472
    %v927 = vlog2.pop %v896
    %v928 = vmul.f32 %v927, 0.6931472
    %v929 = vadd.f32 %v769, %v898
    %v930 = vadd.f32 %v770, %v900
    %v931 = vadd.f32 %v771, %v902
    %v932 = vadd.f32 %v772, %v904
    %v933 = vadd.f32 %v773, %v906
    %v934 = vadd.f32 %v774, %v908
    %v935 = vadd.f32 %v775, %v910
    %v936 = vadd.f32 %v776, %v912
    %v937 = vadd.f32 %v777, %v914
    %v938 = vadd.f32 %v778, %v916
    %v939 = vadd.f32 %v779, %v918
    %v940 = vadd.f32 %v780, %v920
    %v941 = vadd.f32 %v781, %v922
    %v942 = vadd.f32 %v782, %v924
    %v943 = vadd.f32 %v783, %v926
    %v944 = vadd.f32 %v784, %v928
    %v945 = vld [vmem:[%s2] sm:$0xff]
    %v946 = vld [vmem:[%s2 + $0x8] sm:$0xff]
    %v947 = vld [vmem:[%s2 + $0x10] sm:$0xff]
    %v948 = vld [vmem:[%s2 + $0x18] sm:$0xff]
    %v949 = vld [vmem:[%s2 + $0x20] sm:$0xff]
    %v950 = vld [vmem:[%s2 + $0x28] sm:$0xff]
    %v951 = vld [vmem:[%s2 + $0x30] sm:$0xff]
    %v952 = vld [vmem:[%s2 + $0x38] sm:$0xff]
    %v953 = vld [vmem:[%s2 + $0x40] sm:$0xff]
    %v954 = vld [vmem:[%s2 + $0x48] sm:$0xff]
    %v955 = vld [vmem:[%s2 + $0x50] sm:$0xff]
    %v956 = vld [vmem:[%s2 + $0x58] sm:$0xff]
    %v957 = vld [vmem:[%s2 + $0x60] sm:$0xff]
    %v958 = vld [vmem:[%s2 + $0x68] sm:$0xff]
    %v959 = vld [vmem:[%s2 + $0x70] sm:$0xff]
    %v960 = vld [vmem:[%s2 + $0x78] sm:$0xff]
    %v961 = vsub.f32 %v929, %v945
    %v962 = vsub.f32 %v930, %v946
    %v963 = vsub.f32 %v931, %v947
    %v964 = vsub.f32 %v932, %v948
    %v965 = vsub.f32 %v933, %v949
    %v966 = vsub.f32 %v934, %v950
    %v967 = vsub.f32 %v935, %v951
    %v968 = vsub.f32 %v936, %v952
    %v969 = vsub.f32 %v937, %v953
    %v970 = vsub.f32 %v938, %v954
    %v971 = vsub.f32 %v939, %v955
    %v972 = vsub.f32 %v940, %v956
    %v973 = vsub.f32 %v941, %v957
    %v974 = vsub.f32 %v942, %v958
    %v975 = vsub.f32 %v943, %v959
    %v976 = vsub.f32 %v944, %v960
    %977 = vst.msk [vmem:[%s3] sm:$0xff] %vm733, %v961
    %978 = vst.msk [vmem:[%s3 + $0x8] sm:$0xff] %vm733, %v962
    %979 = vst.msk [vmem:[%s3 + $0x10] sm:$0xff] %vm733, %v963
    %980 = vst.msk [vmem:[%s3 + $0x18] sm:$0xff] %vm733, %v964
    %981 = vst.msk [vmem:[%s3 + $0x20] sm:$0xff] %vm733, %v965
    %982 = vst.msk [vmem:[%s3 + $0x28] sm:$0xff] %vm733, %v966
    %983 = vst.msk [vmem:[%s3 + $0x30] sm:$0xff] %vm733, %v967
    %984 = vst.msk [vmem:[%s3 + $0x38] sm:$0xff] %vm733, %v968
    %985 = vst.msk [vmem:[%s3 + $0x40] sm:$0xff] %vm733, %v969
    %986 = vst.msk [vmem:[%s3 + $0x48] sm:$0xff] %vm733, %v970
    %987 = vst.msk [vmem:[%s3 + $0x50] sm:$0xff] %vm733, %v971
    %988 = vst.msk [vmem:[%s3 + $0x58] sm:$0xff] %vm733, %v972
    %989 = vst.msk [vmem:[%s3 + $0x60] sm:$0xff] %vm733, %v973
    %990 = vst.msk [vmem:[%s3 + $0x68] sm:$0xff] %vm733, %v974
    %991 = vst.msk [vmem:[%s3 + $0x70] sm:$0xff] %vm733, %v975
    %992 = vst.msk [vmem:[%s3 + $0x78] sm:$0xff] %vm733, %v976
  $region21: #{tpu_custom_call.1} parent=0 // pred_fallthru
    _
  // Predicated region
  $region22: #{tpu_custom_call.1} parent=0 // pred_check
    _
  $region23: #{tpu_custom_call.1} parent=0 // pred_check_branch
    %994 = sbr.rel (0) target = $region25
  $region24: #{tpu_custom_call.1} parent=0 // pred_region
    _
  $region25: #{tpu_custom_call.1} parent=0 // pred_fallthru
    _
  // Predicated region
  $region26: #{tpu_custom_call.1} parent=0 // pred_check
    _
  $region27: #{tpu_custom_call.1} parent=0 // pred_check_branch
    %996 = sbr.rel (0) target = $region29
  $region28: #{tpu_custom_call.1} parent=0 // pred_region
    _
  $region29: #{tpu_custom_call.1} parent=0 // pred_fallthru
    _

</llo_original>
